<compile_context>
chip_gen: v6e
topology: v6e:2x2x1
jax: 0.10.0
libtpu: 0.0.40
codegen_flags: <defaults>
</compile_context>

<pallas_src>
import jax
import jax.numpy as jnp
from jax.experimental import pallas as pl
from jax.experimental.pallas import tpu as pltpu

# "config" values (synthetic, small, deterministic)
L0 = 256       # config.L0  (input feature count)
L1 = 128       # config.L1  (hidden size)
BATCH = 512    # demo batch (two grid steps with TILE_B=256)
TILE_B = 256   # batch tile per grid step (multiple of 128 -> lane-dense output)


def nnue_kernel(x_ref, w0_ref, b0_ref, w1_ref, b1_ref, o_ref):
    # x_ref : (TILE_B, L0)  bf16   -- streamed batch tile
    # w0_ref: (L1, L0)      bf16   -- resident, torch nn.Linear(L0, L1).weight layout
    # b0_ref: (L1, 1)       f32    -- resident
    # w1_ref: (L1, 1)       f32    -- resident (torch (1, L1) weight, presented as column)
    # b1_ref: (1,)          f32    -- SMEM scalar
    # o_ref : (1, 1, TILE_B) f32   -- lane-dense output row (batch on lanes)

    # Hidden layer on the MXU: H[L1, TILE_B] = W0 @ X_tile^T  (contract over L0).
    h = jax.lax.dot_general(
        w0_ref[...], x_ref[...],
        dimension_numbers=(((1,), (1,)), ((), ())),
        preferred_element_type=jnp.float32,
    )
    # Bias (lane broadcast of an (L1,1) column) + clamp(0, 1) on the VPU.
    h = jnp.clip(h + b0_ref[...], 0.0, 1.0)

    # Output layer on VPU (broadcast multiply) + XLU (sublane reduction):
    # avoids an N=1 MXU matmul entirely. Result is already lane-dense (1, TILE_B).
    out = jnp.sum(h * w1_ref[...], axis=0, keepdims=True) + b1_ref[0]
    o_ref[...] = out.reshape(1, 1, TILE_B)


def nnue_forward(x, w_in, b_in, w_l1, b_l1, *, tile_b=TILE_B):
    """NNUE forward: clamp(x @ w_in.T + b_in, 0, 1) @ w_l1.T + b_l1.

    x    : (B, L0) float
    w_in : (L1, L0)  -- torch nn.Linear(L0, L1).weight layout
    b_in : (L1,)
    w_l1 : (1, L1)   -- torch nn.Linear(L1, 1).weight layout
    b_l1 : (1,)
    returns (B, 1) float32
    """
    B = x.shape[0]
    l1, l0 = w_in.shape
    num_tiles = pl.cdiv(B, tile_b)
    b_pad = num_tiles * tile_b
    if b_pad != B:
        x = jnp.pad(x, ((0, b_pad - B), (0, 0)))

    # bf16 operands for the MXU (f32 accumulation); halves X HBM traffic.
    x_bf16 = x.astype(jnp.bfloat16)
    w0_bf16 = w_in.astype(jnp.bfloat16)
    b0_col = b_in.reshape(l1, 1).astype(jnp.float32)
    w1_col = w_l1.reshape(l1, 1).astype(jnp.float32)
    b1_s = b_l1.reshape(1).astype(jnp.float32)

    flops = 2 * b_pad * l0 * l1 + 2 * b_pad * l1
    bytes_accessed = (b_pad * l0 * 2          # X (bf16)
                      + l1 * l0 * 2           # W0 (bf16, resident)
                      + l1 * 4 + l1 * 4 + 4   # biases + w1
                      + b_pad * 4)            # output

    out = pl.pallas_call(
        nnue_kernel,
        out_shape=jax.ShapeDtypeStruct((num_tiles, 1, tile_b), jnp.float32),
        grid=(num_tiles,),
        in_specs=[
            pl.BlockSpec((tile_b, l0), lambda i: (i, 0)),   # X: streamed per tile
            pl.BlockSpec((l1, l0), lambda i: (0, 0)),       # W0: resident in VMEM
            pl.BlockSpec((l1, 1), lambda i: (0, 0)),        # b0: resident
            pl.BlockSpec((l1, 1), lambda i: (0, 0)),        # w1 column: resident
            pl.BlockSpec(memory_space=pltpu.MemorySpace.SMEM),  # b1 scalar in SMEM
        ],
        out_specs=pl.BlockSpec((1, 1, tile_b), lambda i: (i, 0, 0)),
        compiler_params=pltpu.CompilerParams(
            dimension_semantics=("parallel",)),
        cost_estimate=pl.CostEstimate(
            flops=flops, transcendentals=0, bytes_accessed=bytes_accessed),
    )(x_bf16, w0_bf16, b0_col, w1_col, b1_s)

    # (num_tiles, 1, tile_b) -> (B, 1): contiguous reshape, free layout plumbing.
    return out.reshape(b_pad, 1)[:B]


if __name__ == "__main__":
    key = jax.random.PRNGKey(0)
    k_x, k_w0, k_b0, k_w1, k_b1 = jax.random.split(key, 5)

    # Deterministic parameters in torch's native layouts:
    #   nn.Linear(L0, L1): weight (L1, L0), bias (L1,)
    #   nn.Linear(L1, 1) : weight (1, L1), bias (1,)
    x = jax.random.normal(k_x, (BATCH, L0), dtype=jnp.float32)
    w_in = jax.random.normal(k_w0, (L1, L0), dtype=jnp.float32) * (1.0 / jnp.sqrt(L0))
    b_in = jax.random.normal(k_b0, (L1,), dtype=jnp.float32) * 0.01
    w_l1 = jax.random.normal(k_w1, (1, L1), dtype=jnp.float32) * (1.0 / jnp.sqrt(L1))
    b_l1 = jax.random.normal(k_b1, (1,), dtype=jnp.float32) * 0.01

    out = nnue_forward(x, w_in, b_in, w_l1, b_l1)
    jax.block_until_ready(out)

    # Precision-matched pure-JAX reference (bf16 inputs, f32 accumulation).
    xf = x.astype(jnp.bfloat16).astype(jnp.float32)
    w0f = w_in.astype(jnp.bfloat16).astype(jnp.float32)
    h_ref = jnp.clip(xf @ w0f.T + b_in[None, :], 0.0, 1.0)
    ref = h_ref @ w_l1.T + b_l1[None, :]

    assert out.shape == (BATCH, 1)
    assert jnp.allclose(out, ref, atol=2e-3, rtol=2e-3)

    print("KERNEL_OK")
</pallas_src>

<mosaic_0001>
module attributes {stable_mosaic.version = 11 : i64} {
  func.func @nnue_kernel(%arg0: i32, %arg1: memref<256x256xbf16, #tpu.memory_space<vmem>>, %arg2: memref<128x256xbf16, #tpu.memory_space<vmem>>, %arg3: memref<128x1xf32, #tpu.memory_space<vmem>>, %arg4: memref<128x1xf32, #tpu.memory_space<vmem>>, %arg5: memref<1xf32, #tpu.memory_space<smem>>, %arg6: memref<1x1x256xf32, #tpu.memory_space<vmem>>) attributes {dimension_semantics = [#tpu.dimension_semantics<parallel>], iteration_bounds = array<i64: 2>, scalar_prefetch = 0 : i64, scratch_operands = 0 : i64, tpu.core_type = #tpu.core_type<tc>, window_params = [{transform_indices = @transform_0, window_bounds = array<i64: 256, 256>}, {pipeline_mode = #tpu.pipeline_mode<synchronous>, transform_indices = @transform_1, window_bounds = array<i64: 128, 256>}, {pipeline_mode = #tpu.pipeline_mode<synchronous>, transform_indices = @transform_2, window_bounds = array<i64: 128, 1>}, {pipeline_mode = #tpu.pipeline_mode<synchronous>, transform_indices = @transform_3, window_bounds = array<i64: 128, 1>}, {transform_indices = @transform_4, window_bounds = array<i64: 1>}, {transform_indices = @transform_5, window_bounds = array<i64: 1, 1, 256>}]} {
    %c0 = arith.constant 0 : index
    %c0_0 = arith.constant 0 : index
    %0 = vector.load %arg2[%c0, %c0_0] : memref<128x256xbf16, #tpu.memory_space<vmem>>, vector<128x256xbf16>
    %c0_1 = arith.constant 0 : index
    %c0_2 = arith.constant 0 : index
    %1 = vector.load %arg1[%c0_1, %c0_2] : memref<256x256xbf16, #tpu.memory_space<vmem>>, vector<256x256xbf16>
    %cst = arith.constant dense<0.000000e+00> : vector<128x256xf32>
    %2 = tpu.matmul %0, %1, %cst {dimension_numbers = #tpu.dot_dimension_numbers<[1], [1], [0], [0], [0, 0, 1, 0], [], []>} : vector<128x256xbf16>, vector<256x256xbf16>, vector<128x256xf32> -> vector<128x256xf32>
    %c0_3 = arith.constant 0 : index
    %c0_4 = arith.constant 0 : index
    %3 = vector.load %arg3[%c0_3, %c0_4] : memref<128x1xf32, #tpu.memory_space<vmem>>, vector<128x1xf32>
    %4 = vector.broadcast %3 : vector<128x1xf32> to vector<128x256xf32>
    %5 = arith.addf %2, %4 : vector<128x256xf32>
    %cst_5 = arith.constant 0.000000e+00 : f32
    %cst_6 = arith.constant 1.000000e+00 : f32
    %6 = vector.broadcast %cst_5 : f32 to vector<128x256xf32>
    %7 = arith.maximumf %6, %5 : vector<128x256xf32>
    %8 = vector.broadcast %cst_6 : f32 to vector<128x256xf32>
    %9 = arith.minimumf %8, %7 : vector<128x256xf32>
    %c0_7 = arith.constant 0 : index
    %c0_8 = arith.constant 0 : index
    %10 = vector.load %arg4[%c0_7, %c0_8] : memref<128x1xf32, #tpu.memory_space<vmem>>, vector<128x1xf32>
    %11 = vector.broadcast %10 : vector<128x1xf32> to vector<128x256xf32>
    %12 = arith.mulf %9, %11 : vector<128x256xf32>
    %cst_9 = arith.constant dense<0.000000e+00> : vector<256xf32>
    %13 = vector.multi_reduction <add>, %12, %cst_9 [0] : vector<128x256xf32> to vector<256xf32>
    %14 = vector.shape_cast %13 : vector<256xf32> to vector<1x256xf32>
    %c0_10 = arith.constant 0 : index
    %15 = memref.load %arg5[%c0_10] : memref<1xf32, #tpu.memory_space<smem>>
    %16 = vector.broadcast %15 : f32 to vector<1x256xf32>
    %17 = arith.addf %14, %16 : vector<1x256xf32>
    %18 = vector.shape_cast %17 : vector<1x256xf32> to vector<1x1x256xf32>
    %c0_11 = arith.constant 0 : index
    %c0_12 = arith.constant 0 : index
    %c0_13 = arith.constant 0 : index
    %19 = vector.load %arg6[%c0_11, %c0_12, %c0_13] : memref<1x1x256xf32, #tpu.memory_space<vmem>>, vector<1x1x256xf32>
    tpu.vector_store %arg6[%c0_11, %c0_12, %c0_13], %18 {strides = array<i32>} : memref<1x1x256xf32, #tpu.memory_space<vmem>>, vector<1x1x256xf32>,
    return
  }
  func.func @transform_0(%arg0: i32) -> (i32, i32) {
    %c0_i32 = arith.constant 0 : i32
    %c0_i32_0 = arith.constant 0 : i32
    return %arg0, %c0_i32 : i32, i32
  }
  func.func @transform_1(%arg0: i32) -> (i32, i32) {
    %c0_i32 = arith.constant 0 : i32
    %c0_i32_0 = arith.constant 0 : i32
    %c0_i32_1 = arith.constant 0 : i32
    return %c0_i32, %c0_i32_0 : i32, i32
  }
  func.func @transform_2(%arg0: i32) -> (i32, i32) {
    %c0_i32 = arith.constant 0 : i32
    %c0_i32_0 = arith.constant 0 : i32
    %c0_i32_1 = arith.constant 0 : i32
    return %c0_i32, %c0_i32_0 : i32, i32
  }
  func.func @transform_3(%arg0: i32) -> (i32, i32) {
    %c0_i32 = arith.constant 0 : i32
    %c0_i32_0 = arith.constant 0 : i32
    %c0_i32_1 = arith.constant 0 : i32
    return %c0_i32, %c0_i32_0 : i32, i32
  }
  func.func @transform_4(%arg0: i32) -> i32 {
    %c0_i32 = arith.constant 0 : i32
    %c0_i32_0 = arith.constant 0 : i32
    return %c0_i32 : i32
  }
  func.func @transform_5(%arg0: i32) -> (i32, i32, i32) {
    %c0_i32 = arith.constant 0 : i32
    %c0_i32_0 = arith.constant 0 : i32
    %c0_i32_1 = arith.constant 0 : i32
    return %arg0, %c0_i32, %c0_i32_0 : i32, i32, i32
  }
}

</mosaic_0001>

<llo_original>
// kernel: tpu_custom_call.1
$region0: #{tpu_custom_call.1}
  #allocation0 [shape = 'u32[]', space=smem, size = 0x4, offset = 0x4, fixed_abs, tag = 'smem constant byte address 0x4 - core index']
  #allocation1 [shape = 'u32[144,128]{1,0:T(1,128)}', space=vmem, size = 0x12000, scoped, tag = 'internal scratch']
  #allocation2 [shape = 'f32[1]{0:T(128)S(6)}', space=smem, size = 0x200, scoped, tag = 'scoped memory for tpu_custom_call.1']
  %s0 = inlined_call_operand.hbm [shape: bf16[512,256], index: 0, kind: input, shape index: {}]
  %s1 = inlined_call_operand.vmem [shape: bf16[128,256], index: 1, kind: input, shape index: {}]
  %s2 = inlined_call_operand.vmem [shape: f32[128,1], index: 2, kind: input, shape index: {}]
  %s3 = inlined_call_operand.vmem [shape: f32[128,1], index: 3, kind: input, shape index: {}]
  %s4 = inlined_call_operand.<no memory space> [shape: f32[1], index: 4, kind: input, shape index: {}]
  %s5 = inlined_call_operand.hbm [shape: f32[2,1,256], index: 5, kind: output, shape index: {}]
  %s6 = sld [smem:[#allocation0]]
  $region57: #{tpu_custom_call.1} parent=0
    _
  %s8 = ssub.s32 1, %s6
  %s9 = scalar_select 0, %s8, %s6
  %10 = sst [smem:[#allocation2]] %s4
  $region1: #{tpu_custom_call.1} parent=0
    #allocation3 [shape = 'u8[262144]{0}', space=vmem, size = 0x40000, scoped, tag = 'input window, operand 0']
    #allocation4 [shape = 's32[2]{0}', space=sflag, size = 0x8, scoped, tag = 'scoped memory for tpu_custom_call.1']
    #allocation5 [shape = 's32[2]{0}', space=sflag, size = 0x8, scoped, tag = 'scoped memory for tpu_custom_call.1']
    #allocation6 [shape = 'u8[2048]{0}', space=vmem, size = 0x800, scoped, tag = 'output window, operand 0']
    %11 = vsyncpa [#allocation4], 0
    %s12 = scalar_lea.sflag [#allocation4], 1
    %13 = vsyncpa %s12, 0
    %14 = vsyncpa [#allocation5], 0
    %s15 = scalar_lea.sflag [#allocation5], 1
    %16 = vsyncpa %s15, 0
    loop: start=0, step=1, limit=4
    $region2: #{tpu_custom_call.1} parent=1 // loop_pre_header
      _
    $region3: #{tpu_custom_call.1} parent=1 // loop_header
      %s18 = sphi 0, %s22
      %p19 = scmp.ge.s32.totalorder %s18, 4
      %s28 = sphi 0, %s30
      %s31 = sphi 0, %s28
      %s32 = sphi 0, %s31
      %s48 = sphi 0, %s32
      %s52 = sphi 0, %s52
      %s54 = sphi 0, %s52
      %s55 = sphi 0, %s54
      %s69 = sphi 0, %s55
      %s73 = sphi 0, %s73
      %s75 = sphi 0, %s73
      %s76 = sphi 0, %s75
      %s90 = sphi 0, %s76
      %s94 = sphi 0, %s94
      %s96 = sphi 0, %s94
      %s97 = sphi 0, %s96
      %s111 = sphi 0, %s97
      %s115 = sphi 0, %s115
      %s117 = sphi 0, %s115
      %s118 = sphi 0, %s117
      %s132 = sphi 0, %s118
      %s138 = sphi 0, %s140
      %s141 = sphi 0, %s138
      %s142 = sphi 0, %s141
      %s158 = sphi 0, %s142
    $region4: #{tpu_custom_call.1} parent=1 // loop_header_branch
      %21 = sbr.rel (%p19) target = $region8
    $region5: #{tpu_custom_call.1} parent=1 // loop_body
      %s23 = ssub.s32 %s18, 1
      %s24 = ssub.s32 %s18, 2
      %s25 = sadd.s32 %s18, 1
      %s26 = ssub.s32 %s18, %s25
      %p27 = scmp.eq.s32.totalorder %s26, 0
      %s29 = sadd.s32 %s28, 1
      %s30 = scalar_select %p27, %s28, %s29
      %p33 = pneg %p27
      %p34 = scmp.eq.s32.totalorder %s18, 1
      %p35 = por %p33, %p34
      %p36 = scmp.ne.s32.totalorder %s28, %s31
      %p37 = scmp.eq.s32.totalorder %s18, 0
      %p38 = por %p36, %p37
      %p39 = scmp.ne.s32.totalorder %s28, %s31
      %p40 = scmp.eq.s32.totalorder %s23, 1
      %p41 = por %p39, %p40
      %p42 = scmp.ne.s32.totalorder %s31, %s32
      %p43 = scmp.eq.s32.totalorder %s23, 0
      %p44 = por %p42, %p43
      %p45 = scmp.ne.s32.totalorder %s31, %s32
      %p46 = scmp.eq.s32.totalorder %s24, 1
      %p47 = por %p45, %p46
      %p49 = scmp.ne.s32.totalorder %s32, %s48
      %p50 = scmp.eq.s32.totalorder %s24, 0
      %p51 = por %p49, %p50
      %s53 = sadd.s32 %s52, 1
      %p56 = scmp.eq.s32.totalorder %s18, 1
      %p57 = scmp.ne.s32.totalorder %s52, %s54
      %p58 = scmp.eq.s32.totalorder %s18, 0
      %p59 = por %p57, %p58
      %p60 = scmp.ne.s32.totalorder %s52, %s54
      %p61 = scmp.eq.s32.totalorder %s23, 1
      %p62 = por %p60, %p61
      %p63 = scmp.ne.s32.totalorder %s54, %s55
      %p64 = scmp.eq.s32.totalorder %s23, 0
      %p65 = por %p63, %p64
      %p66 = scmp.ne.s32.totalorder %s54, %s55
      %p67 = scmp.eq.s32.totalorder %s24, 1
      %p68 = por %p66, %p67
      %p70 = scmp.ne.s32.totalorder %s55, %s69
      %p71 = scmp.eq.s32.totalorder %s24, 0
      %p72 = por %p70, %p71
      %s74 = sadd.s32 %s73, 1
      %p77 = scmp.eq.s32.totalorder %s18, 1
      %p78 = scmp.ne.s32.totalorder %s73, %s75
      %p79 = scmp.eq.s32.totalorder %s18, 0
      %p80 = por %p78, %p79
      %p81 = scmp.ne.s32.totalorder %s73, %s75
      %p82 = scmp.eq.s32.totalorder %s23, 1
      %p83 = por %p81, %p82
      %p84 = scmp.ne.s32.totalorder %s75, %s76
      %p85 = scmp.eq.s32.totalorder %s23, 0
      %p86 = por %p84, %p85
      %p87 = scmp.ne.s32.totalorder %s75, %s76
      %p88 = scmp.eq.s32.totalorder %s24, 1
      %p89 = por %p87, %p88
      %p91 = scmp.ne.s32.totalorder %s76, %s90
      %p92 = scmp.eq.s32.totalorder %s24, 0
      %p93 = por %p91, %p92
      %s95 = sadd.s32 %s94, 1
      %p98 = scmp.eq.s32.totalorder %s18, 1
      %p99 = scmp.ne.s32.totalorder %s94, %s96
      %p100 = scmp.eq.s32.totalorder %s18, 0
      %p101 = por %p99, %p100
      %p102 = scmp.ne.s32.totalorder %s94, %s96
      %p103 = scmp.eq.s32.totalorder %s23, 1
      %p104 = por %p102, %p103
      %p105 = scmp.ne.s32.totalorder %s96, %s97
      %p106 = scmp.eq.s32.totalorder %s23, 0
      %p107 = por %p105, %p106
      %p108 = scmp.ne.s32.totalorder %s96, %s97
      %p109 = scmp.eq.s32.totalorder %s24, 1
      %p110 = por %p108, %p109
      %p112 = scmp.ne.s32.totalorder %s97, %s111
      %p113 = scmp.eq.s32.totalorder %s24, 0
      %p114 = por %p112, %p113
      %s116 = sadd.s32 %s115, 1
      %p119 = scmp.eq.s32.totalorder %s18, 1
      %p120 = scmp.ne.s32.totalorder %s115, %s117
      %p121 = scmp.eq.s32.totalorder %s18, 0
      %p122 = por %p120, %p121
      %p123 = scmp.ne.s32.totalorder %s115, %s117
      %p124 = scmp.eq.s32.totalorder %s23, 1
      %p125 = por %p123, %p124
      %p126 = scmp.ne.s32.totalorder %s117, %s118
      %p127 = scmp.eq.s32.totalorder %s23, 0
      %p128 = por %p126, %p127
      %p129 = scmp.ne.s32.totalorder %s117, %s118
      %p130 = scmp.eq.s32.totalorder %s24, 1
      %p131 = por %p129, %p130
      %p133 = scmp.ne.s32.totalorder %s118, %s132
      %p134 = scmp.eq.s32.totalorder %s24, 0
      %p135 = por %p133, %p134
      %s136 = ssub.s32 %s18, %s25
      %p137 = scmp.eq.s32.totalorder %s136, 0
      %s139 = sadd.s32 %s138, 1
      %s140 = scalar_select %p137, %s138, %s139
      %p143 = pneg %p137
      %p144 = scmp.eq.s32.totalorder %s18, 1
      %p145 = por %p143, %p144
      %p146 = scmp.ne.s32.totalorder %s138, %s141
      %p147 = scmp.eq.s32.totalorder %s18, 0
      %p148 = por %p146, %p147
      %p149 = scmp.ne.s32.totalorder %s138, %s141
      %p150 = scmp.eq.s32.totalorder %s23, 1
      %p151 = por %p149, %p150
      %p152 = scmp.ne.s32.totalorder %s141, %s142
      %p153 = scmp.eq.s32.totalorder %s23, 0
      %p154 = por %p152, %p153
      %p155 = scmp.ne.s32.totalorder %s141, %s142
      %p156 = scmp.eq.s32.totalorder %s24, 1
      %p157 = por %p155, %p156
      %p159 = scmp.ne.s32.totalorder %s142, %s158
      %p160 = scmp.eq.s32.totalorder %s24, 0
      %p161 = por %p159, %p160
      %p162 = scmp.le.s32.totalorder 1, %s18
      %p163 = scmp.lt.s32.totalorder %s18, 3
      %p164 = pnand %p162, %p163
      %p165 = pneg %p164
      // Predicated region
      $region9: #{tpu_custom_call.1} parent=5 // pred_check
        _
      $region10: #{tpu_custom_call.1} parent=5 // pred_check_branch
        %167 = sbr.rel (%p164) target = $region12
      $region11: #{tpu_custom_call.1} parent=5 // pred_region
        %s168 = ssub.s32 %s18, 1
        // Predicated region
        $region13: #{tpu_custom_call.1} parent=11 // pred_check
          %p169 = pneg %p65
        $region14: #{tpu_custom_call.1} parent=11 // pred_check_branch
          %171 = sbr.rel (%p169) target = $region16
        $region15: #{tpu_custom_call.1} parent=11 // pred_region
          _
        $region16: #{tpu_custom_call.1} parent=11 // pred_fallthru
          _
        // Predicated region
        $region17: #{tpu_custom_call.1} parent=11 // pred_check
          %p172 = pneg %p86
        $region18: #{tpu_custom_call.1} parent=11 // pred_check_branch
          %174 = sbr.rel (%p172) target = $region20
        $region19: #{tpu_custom_call.1} parent=11 // pred_region
          _
        $region20: #{tpu_custom_call.1} parent=11 // pred_fallthru
          _
        // Predicated region
        $region21: #{tpu_custom_call.1} parent=11 // pred_check
          %p175 = pneg %p107
        $region22: #{tpu_custom_call.1} parent=11 // pred_check_branch
          %177 = sbr.rel (%p175) target = $region24
        $region23: #{tpu_custom_call.1} parent=11 // pred_region
          _
        $region24: #{tpu_custom_call.1} parent=11 // pred_fallthru
          _
        // Predicated region
        $region25: #{tpu_custom_call.1} parent=11 // pred_check
          %p178 = pneg %p128
        $region26: #{tpu_custom_call.1} parent=11 // pred_check_branch
          %180 = sbr.rel (%p178) target = $region28
        $region27: #{tpu_custom_call.1} parent=11 // pred_region
          _
        $region28: #{tpu_custom_call.1} parent=11 // pred_fallthru
          _
      $region12: #{tpu_custom_call.1} parent=5 // pred_fallthru
        _
      %p181 = scmp.lt.s32.totalorder %s18, 2
      // Predicated region
      $region29: #{tpu_custom_call.1} parent=5 // pred_check
        %p182 = pneg %p181
      $region30: #{tpu_custom_call.1} parent=5 // pred_check_branch
        %184 = sbr.rel (%p182) target = $region32
      $region31: #{tpu_custom_call.1} parent=5 // pred_region
        // Predicated region
        $region33: #{tpu_custom_call.1} parent=31 // pred_check
          %p185 = pneg %p38
        $region34: #{tpu_custom_call.1} parent=31 // pred_check_branch
          %187 = sbr.rel (%p185) target = $region36
        $region35: #{tpu_custom_call.1} parent=31 // pred_region
          %s188 = sand.u32 %s28, 1
          %s189 = scalar_lea.sflag [#allocation4], %s188
          %s190 = sand.u32 %s28, 1
          %s191 = smul.addr %s190, 256
          %s192 = scalar_lea.vmem [#allocation3], %s191
          %s193 = smul.u32 32, %s18
          %s195 = ssub.s32 4096, 4096
          %196 = vsyncadd %s189, %s195
          %s197 = smul.addr %s193, 2
          %s198 = smul.addr %s197, 64
          %s199 = scalar_lea.hbm %s0, %s198
          %s200 = sshll.u32 %s192, 4
          %s201 = int_to_ptr.vmem [resolvable:$true] %s200
          %206 = dma.hbm_to_vmem [thread:$0]  %s199, 4096, %s201, %s189, 128, 128, 8
        $region36: #{tpu_custom_call.1} parent=31 // pred_fallthru
          _
      $region32: #{tpu_custom_call.1} parent=5 // pred_fallthru
        _
      %p207 = scmp.le.s32.totalorder 1, %s18
      %p208 = scmp.lt.s32.totalorder %s18, 3
      %p209 = pnand %p207, %p208
      %p210 = pneg %p209
      // Predicated region
      $region37: #{tpu_custom_call.1} parent=5 // pred_check
        _
      $region38: #{tpu_custom_call.1} parent=5 // pred_check_branch
        %212 = sbr.rel (%p209) target = $region40
      $region39: #{tpu_custom_call.1} parent=5 // pred_region
        %s213 = ssub.s32 %s18, 1
        %s214 = sand.u32 %s31, 1
        %s215 = scalar_lea.sflag [#allocation4], %s214
        %s216 = sand.u32 %s31, 1
        %s217 = smul.addr %s216, 256
        %s218 = scalar_lea.vmem [#allocation3], %s217
        // Predicated region
        $region41: #{tpu_custom_call.1} parent=39 // pred_check
          %p219 = pneg %p44
        $region42: #{tpu_custom_call.1} parent=39 // pred_check_branch
          %221 = sbr.rel (%p219) target = $region44
        $region43: #{tpu_custom_call.1} parent=39 // pred_region
          %222 = dma.done %s215, 4096
        $region44: #{tpu_custom_call.1} parent=39 // pred_fallthru
          _
        %s223 = sand.u32 %s31, 1
        %s224 = scalar_lea.sflag [#allocation4], %s223
        %s225 = sand.u32 %s31, 1
        %s226 = smul.addr %s225, 256
        %s227 = scalar_lea.vmem [#allocation3], %s226
        %p228 = pneg %p44
        %p229 = pneg %p41
        %p230 = pneg %p65
        %p231 = pneg %p62
        %p232 = pneg %p86
        %p233 = pneg %p83
        %p234 = pneg %p107
        %p235 = pneg %p104
        %p236 = pneg %p128
        %p237 = pneg %p125
        %p238 = pneg %p154
        %p239 = pneg %p151
        %s240 = sand.u32 %s141, 1
        %s241 = scalar_lea.sflag [#allocation5], %s240
        %s242 = sand.u32 %s141, 1
        %s243 = smul.addr %s242, 2
        %s244 = scalar_lea.vmem [#allocation6], %s243
        %s245 = smul.u32 32, %s23
        %v246 = vld [vmem:[%s1] sm:$0xff]
        %v247 = vld [vmem:[%s1 + $0x8] sm:$0xff]
        %v248 = vld [vmem:[%s1 + $0x10] sm:$0xff]
        %v249 = vld [vmem:[%s1 + $0x18] sm:$0xff]
        %v250 = vld [vmem:[%s1 + $0x20] sm:$0xff]
        %v251 = vld [vmem:[%s1 + $0x28] sm:$0xff]
        %v252 = vld [vmem:[%s1 + $0x30] sm:$0xff]
        %v253 = vld [vmem:[%s1 + $0x38] sm:$0xff]
        %v254 = vld [vmem:[%s1 + $0x40] sm:$0xff]
        %v255 = vld [vmem:[%s1 + $0x48] sm:$0xff]
        %v256 = vld [vmem:[%s1 + $0x50] sm:$0xff]
        %v257 = vld [vmem:[%s1 + $0x58] sm:$0xff]
        %v258 = vld [vmem:[%s1 + $0x60] sm:$0xff]
        %v259 = vld [vmem:[%s1 + $0x68] sm:$0xff]
        %v260 = vld [vmem:[%s1 + $0x70] sm:$0xff]
        %v261 = vld [vmem:[%s1 + $0x78] sm:$0xff]
        %v262 = vld [vmem:[%s218] sm:$0xff]
        %v263 = vld [vmem:[%s218 + $0x8] sm:$0xff]
        %v264 = vld [vmem:[%s218 + $0x10] sm:$0xff]
        %v265 = vld [vmem:[%s218 + $0x18] sm:$0xff]
        %v266 = vld [vmem:[%s218 + $0x20] sm:$0xff]
        %v267 = vld [vmem:[%s218 + $0x28] sm:$0xff]
        %v268 = vld [vmem:[%s218 + $0x30] sm:$0xff]
        %v269 = vld [vmem:[%s218 + $0x38] sm:$0xff]
        %v270 = vld [vmem:[%s218 + $0x40] sm:$0xff]
        %v271 = vld [vmem:[%s218 + $0x48] sm:$0xff]
        %v272 = vld [vmem:[%s218 + $0x50] sm:$0xff]
        %v273 = vld [vmem:[%s218 + $0x58] sm:$0xff]
        %v274 = vld [vmem:[%s218 + $0x60] sm:$0xff]
        %v275 = vld [vmem:[%s218 + $0x68] sm:$0xff]
        %v276 = vld [vmem:[%s218 + $0x70] sm:$0xff]
        %v277 = vld [vmem:[%s218 + $0x78] sm:$0xff]
        %v278 = vld [vmem:[%s218 + $0x80] sm:$0xff]
        %v279 = vld [vmem:[%s218 + $0x88] sm:$0xff]
        %v280 = vld [vmem:[%s218 + $0x90] sm:$0xff]
        %v281 = vld [vmem:[%s218 + $0x98] sm:$0xff]
        %v282 = vld [vmem:[%s218 + $0xa0] sm:$0xff]
        %v283 = vld [vmem:[%s218 + $0xa8] sm:$0xff]
        %v284 = vld [vmem:[%s218 + $0xb0] sm:$0xff]
        %v285 = vld [vmem:[%s218 + $0xb8] sm:$0xff]
        %v286 = vld [vmem:[%s218 + $0xc0] sm:$0xff]
        %v287 = vld [vmem:[%s218 + $0xc8] sm:$0xff]
        %v288 = vld [vmem:[%s218 + $0xd0] sm:$0xff]
        %v289 = vld [vmem:[%s218 + $0xd8] sm:$0xff]
        %v290 = vld [vmem:[%s218 + $0xe0] sm:$0xff]
        %v291 = vld [vmem:[%s218 + $0xe8] sm:$0xff]
        %v292 = vld [vmem:[%s218 + $0xf0] sm:$0xff]
        %v293 = vld [vmem:[%s218 + $0xf8] sm:$0xff]
        %v294 = vld [vmem:[%s2] sm:$0xff]
        %v295 = vld [vmem:[%s2 + $0x8] sm:$0xff]
        %v296 = vld [vmem:[%s2 + $0x10] sm:$0xff]
        %v297 = vld [vmem:[%s2 + $0x18] sm:$0xff]
        %v298 = vld [vmem:[%s2 + $0x20] sm:$0xff]
        %v299 = vld [vmem:[%s2 + $0x28] sm:$0xff]
        %v300 = vld [vmem:[%s2 + $0x30] sm:$0xff]
        %v301 = vld [vmem:[%s2 + $0x38] sm:$0xff]
        %v302 = vld [vmem:[%s2 + $0x40] sm:$0xff]
        %v303 = vld [vmem:[%s2 + $0x48] sm:$0xff]
        %v304 = vld [vmem:[%s2 + $0x50] sm:$0xff]
        %v305 = vld [vmem:[%s2 + $0x58] sm:$0xff]
        %v306 = vld [vmem:[%s2 + $0x60] sm:$0xff]
        %v307 = vld [vmem:[%s2 + $0x68] sm:$0xff]
        %v308 = vld [vmem:[%s2 + $0x70] sm:$0xff]
        %v309 = vld [vmem:[%s2 + $0x78] sm:$0xff]
        %311 = vset.pattern.permute.xlu0 0
        %312 = vperm.xlu0 %311, %v294
        %v313 = vpop.permute.xlu0 %312
        %316 = vset.pattern.permute.xlu0 0
        %317 = vperm.xlu0 %316, %v295
        %v318 = vpop.permute.xlu0 %317
        %321 = vset.pattern.permute.xlu0 0
        %322 = vperm.xlu0 %321, %v296
        %v323 = vpop.permute.xlu0 %322
        %326 = vset.pattern.permute.xlu0 0
        %327 = vperm.xlu0 %326, %v297
        %v328 = vpop.permute.xlu0 %327
        %331 = vset.pattern.permute.xlu0 0
        %332 = vperm.xlu0 %331, %v298
        %v333 = vpop.permute.xlu0 %332
        %336 = vset.pattern.permute.xlu0 0
        %337 = vperm.xlu0 %336, %v299
        %v338 = vpop.permute.xlu0 %337
        %341 = vset.pattern.permute.xlu0 0
        %342 = vperm.xlu0 %341, %v300
        %v343 = vpop.permute.xlu0 %342
        %346 = vset.pattern.permute.xlu0 0
        %347 = vperm.xlu0 %346, %v301
        %v348 = vpop.permute.xlu0 %347
        %351 = vset.pattern.permute.xlu0 0
        %352 = vperm.xlu0 %351, %v302
        %v353 = vpop.permute.xlu0 %352
        %356 = vset.pattern.permute.xlu0 0
        %357 = vperm.xlu0 %356, %v303
        %v358 = vpop.permute.xlu0 %357
        %361 = vset.pattern.permute.xlu0 0
        %362 = vperm.xlu0 %361, %v304
        %v363 = vpop.permute.xlu0 %362
        %366 = vset.pattern.permute.xlu0 0
        %367 = vperm.xlu0 %366, %v305
        %v368 = vpop.permute.xlu0 %367
        %371 = vset.pattern.permute.xlu0 0
        %372 = vperm.xlu0 %371, %v306
        %v373 = vpop.permute.xlu0 %372
        %376 = vset.pattern.permute.xlu0 0
        %377 = vperm.xlu0 %376, %v307
        %v378 = vpop.permute.xlu0 %377
        %381 = vset.pattern.permute.xlu0 0
        %382 = vperm.xlu0 %381, %v308
        %v383 = vpop.permute.xlu0 %382
        %386 = vset.pattern.permute.xlu0 0
        %387 = vperm.xlu0 %386, %v309
        %v388 = vpop.permute.xlu0 %387
        %v406 = vunpack.c.l.b16 %v246
        %v407 = vunpack.c.h.b16 %v246
        %v408 = vunpack.c.l.b16 %v247
        %v409 = vunpack.c.h.b16 %v247
        %v410 = vunpack.c.l.b16 %v248
        %v411 = vunpack.c.h.b16 %v248
        %v412 = vunpack.c.l.b16 %v249
        %v413 = vunpack.c.h.b16 %v249
        %v414 = vunpack.c.l.b16 %v250
        %v415 = vunpack.c.h.b16 %v250
        %v416 = vunpack.c.l.b16 %v251
        %v417 = vunpack.c.h.b16 %v251
        %v418 = vunpack.c.l.b16 %v252
        %v419 = vunpack.c.h.b16 %v252
        %v420 = vunpack.c.l.b16 %v253
        %v421 = vunpack.c.h.b16 %v253
        %v422 = vunpack.c.l.b16 %v254
        %v423 = vunpack.c.h.b16 %v254
        %v424 = vunpack.c.l.b16 %v255
        %v425 = vunpack.c.h.b16 %v255
        %v426 = vunpack.c.l.b16 %v256
        %v427 = vunpack.c.h.b16 %v256
        %v428 = vunpack.c.l.b16 %v257
        %v429 = vunpack.c.h.b16 %v257
        %v430 = vunpack.c.l.b16 %v258
        %v431 = vunpack.c.h.b16 %v258
        %v432 = vunpack.c.l.b16 %v259
        %v433 = vunpack.c.h.b16 %v259
        %v434 = vunpack.c.l.b16 %v260
        %v435 = vunpack.c.h.b16 %v260
        %v436 = vunpack.c.l.b16 %v261
        %v437 = vunpack.c.h.b16 %v261
        %v438 = vpack.c.b16 %v408, %v406
        %v439 = vpack.c.b16 %v409, %v407
        %v440 = vpack.c.b16 %v412, %v410
        %v441 = vpack.c.b16 %v413, %v411
        %v442 = vpack.c.b16 %v416, %v414
        %v443 = vpack.c.b16 %v417, %v415
        %v444 = vpack.c.b16 %v420, %v418
        %v445 = vpack.c.b16 %v421, %v419
        %v446 = vpack.c.b16 %v424, %v422
        %v447 = vpack.c.b16 %v425, %v423
        %v448 = vpack.c.b16 %v428, %v426
        %v449 = vpack.c.b16 %v429, %v427
        %v450 = vpack.c.b16 %v432, %v430
        %v451 = vpack.c.b16 %v433, %v431
        %v452 = vpack.c.b16 %v436, %v434
        %v453 = vpack.c.b16 %v437, %v435
        %v502 = vunpack.c.l.b16 %v262
        %v503 = vunpack.c.h.b16 %v262
        %v504 = vunpack.c.l.b16 %v263
        %v505 = vunpack.c.h.b16 %v263
        %v506 = vunpack.c.l.b16 %v264
        %v507 = vunpack.c.h.b16 %v264
        %v508 = vunpack.c.l.b16 %v265
        %v509 = vunpack.c.h.b16 %v265
        %v510 = vunpack.c.l.b16 %v266
        %v511 = vunpack.c.h.b16 %v266
        %v512 = vunpack.c.l.b16 %v267
        %v513 = vunpack.c.h.b16 %v267
        %v514 = vunpack.c.l.b16 %v268
        %v515 = vunpack.c.h.b16 %v268
        %v516 = vunpack.c.l.b16 %v269
        %v517 = vunpack.c.h.b16 %v269
        %v518 = vunpack.c.l.b16 %v270
        %v519 = vunpack.c.h.b16 %v270
        %v520 = vunpack.c.l.b16 %v271
        %v521 = vunpack.c.h.b16 %v271
        %v522 = vunpack.c.l.b16 %v272
        %v523 = vunpack.c.h.b16 %v272
        %v524 = vunpack.c.l.b16 %v273
        %v525 = vunpack.c.h.b16 %v273
        %v526 = vunpack.c.l.b16 %v274
        %v527 = vunpack.c.h.b16 %v274
        %v528 = vunpack.c.l.b16 %v275
        %v529 = vunpack.c.h.b16 %v275
        %v530 = vunpack.c.l.b16 %v276
        %v531 = vunpack.c.h.b16 %v276
        %v532 = vunpack.c.l.b16 %v277
        %v533 = vunpack.c.h.b16 %v277
        %v534 = vunpack.c.l.b16 %v278
        %v535 = vunpack.c.h.b16 %v278
        %v536 = vunpack.c.l.b16 %v279
        %v537 = vunpack.c.h.b16 %v279
        %v538 = vunpack.c.l.b16 %v280
        %v539 = vunpack.c.h.b16 %v280
        %v540 = vunpack.c.l.b16 %v281
        %v541 = vunpack.c.h.b16 %v281
        %v542 = vunpack.c.l.b16 %v282
        %v543 = vunpack.c.h.b16 %v282
        %v544 = vunpack.c.l.b16 %v283
        %v545 = vunpack.c.h.b16 %v283
        %v546 = vunpack.c.l.b16 %v284
        %v547 = vunpack.c.h.b16 %v284
        %v548 = vunpack.c.l.b16 %v285
        %v549 = vunpack.c.h.b16 %v285
        %v550 = vunpack.c.l.b16 %v286
        %v551 = vunpack.c.h.b16 %v286
        %v552 = vunpack.c.l.b16 %v287
        %v553 = vunpack.c.h.b16 %v287
        %v554 = vunpack.c.l.b16 %v288
        %v555 = vunpack.c.h.b16 %v288
        %v556 = vunpack.c.l.b16 %v289
        %v557 = vunpack.c.h.b16 %v289
        %v558 = vunpack.c.l.b16 %v290
        %v559 = vunpack.c.h.b16 %v290
        %v560 = vunpack.c.l.b16 %v291
        %v561 = vunpack.c.h.b16 %v291
        %v562 = vunpack.c.l.b16 %v292
        %v563 = vunpack.c.h.b16 %v292
        %v564 = vunpack.c.l.b16 %v293
        %v565 = vunpack.c.h.b16 %v293
        %v566 = vpack.c.b16 %v504, %v502
        %v567 = vpack.c.b16 %v505, %v503
        %v568 = vpack.c.b16 %v508, %v506
        %v569 = vpack.c.b16 %v509, %v507
        %v570 = vpack.c.b16 %v512, %v510
        %v571 = vpack.c.b16 %v513, %v511
        %v572 = vpack.c.b16 %v516, %v514
        %v573 = vpack.c.b16 %v517, %v515
        %v574 = vpack.c.b16 %v520, %v518
        %v575 = vpack.c.b16 %v521, %v519
        %v576 = vpack.c.b16 %v524, %v522
        %v577 = vpack.c.b16 %v525, %v523
        %v578 = vpack.c.b16 %v528, %v526
        %v579 = vpack.c.b16 %v529, %v527
        %v580 = vpack.c.b16 %v532, %v530
        %v581 = vpack.c.b16 %v533, %v531
        %v582 = vpack.c.b16 %v536, %v534
        %v583 = vpack.c.b16 %v537, %v535
        %v584 = vpack.c.b16 %v540, %v538
        %v585 = vpack.c.b16 %v541, %v539
        %v586 = vpack.c.b16 %v544, %v542
        %v587 = vpack.c.b16 %v545, %v543
        %v588 = vpack.c.b16 %v548, %v546
        %v589 = vpack.c.b16 %v549, %v547
        %v590 = vpack.c.b16 %v552, %v550
        %v591 = vpack.c.b16 %v553, %v551
        %v592 = vpack.c.b16 %v556, %v554
        %v593 = vpack.c.b16 %v557, %v555
        %v594 = vpack.c.b16 %v560, %v558
        %v595 = vpack.c.b16 %v561, %v559
        %v596 = vpack.c.b16 %v564, %v562
        %v597 = vpack.c.b16 %v565, %v563
        %630 = vmatprep.subr.bf16.mxu0 %v581
        %631 = vmatpush1.bf16.xpose.msra.mxu0 %v580
        %632 = vmatprep.subr.bf16.mxu0 %v579
        %633 = vmatpush1.bf16.xpose.msra.mxu0 %v578
        %634 = vmatprep.subr.bf16.mxu0 %v577
        %635 = vmatpush1.bf16.xpose.msra.mxu0 %v576
        %636 = vmatprep.subr.bf16.mxu0 %v575
        %637 = vmatpush1.bf16.xpose.msra.mxu0 %v574
        %638 = vmatprep.subr.bf16.mxu0 %v573
        %639 = vmatpush1.bf16.xpose.msra.mxu0 %v572
        %640 = vmatprep.subr.bf16.mxu0 %v571
        %641 = vmatpush1.bf16.xpose.msra.mxu0 %v570
        %642 = vmatprep.subr.bf16.mxu0 %v569
        %643 = vmatpush1.bf16.xpose.msra.mxu0 %v568
        %644 = vmatprep.subr.bf16.mxu0 %v567
        %645 = vmatpush1.bf16.xpose.msra.mxu0 %v566
        %646 = vmatprep.subr.bf16.mxu0 %v597
        %647 = vmatpush2.bf16.xpose.msra.mxu0 %v596
        %648 = vmatprep.subr.bf16.mxu0 %v595
        %649 = vmatpush2.bf16.xpose.msra.mxu0 %v594
        %650 = vmatprep.subr.bf16.mxu0 %v593
        %651 = vmatpush2.bf16.xpose.msra.mxu0 %v592
        %652 = vmatprep.subr.bf16.mxu0 %v591
        %653 = vmatpush2.bf16.xpose.msra.mxu0 %v590
        %654 = vmatprep.subr.bf16.mxu0 %v589
        %655 = vmatpush2.bf16.xpose.msra.mxu0 %v588
        %656 = vmatprep.subr.bf16.mxu0 %v587
        %657 = vmatpush2.bf16.xpose.msra.mxu0 %v586
        %658 = vmatprep.subr.bf16.mxu0 %v585
        %659 = vmatpush2.bf16.xpose.msra.mxu0 %v584
        %660 = vmatprep.subr.bf16.mxu0 %v583
        %661 = vmatpush2.bf16.xpose.msra.mxu0 %v582
        %662 = vmatprep.mubr.bf16.mxu0 %v439
        %663 = vmatmul.mubr.bf16.gmra.mxu0 %v438
        %v664 = vpop.f32.mrf.mxu0
        %v665 = vadd.f32 %v313, %v664
        %v666 = vpop.f32.mrf.mxu0
        %v667 = vadd.f32 %v313, %v666
        %v668 = vpop.f32.mrf.mxu0
        %v669 = vadd.f32 %v318, %v668
        %v670 = vpop.f32.mrf.mxu0
        %v671 = vadd.f32 %v318, %v670
        %672 = vmatprep.mubr.bf16.mxu0 %v441
        %673 = vmatmul.mubr.bf16.gmra.mxu0 %v440
        %v674 = vpop.f32.mrf.mxu0
        %v675 = vadd.f32 %v323, %v674
        %v676 = vpop.f32.mrf.mxu0
        %v677 = vadd.f32 %v323, %v676
        %v678 = vpop.f32.mrf.mxu0
        %v679 = vadd.f32 %v328, %v678
        %v680 = vpop.f32.mrf.mxu0
        %v681 = vadd.f32 %v328, %v680
        %682 = vmatprep.mubr.bf16.mxu0 %v443
        %683 = vmatmul.mubr.bf16.gmra.mxu0 %v442
        %v684 = vpop.f32.mrf.mxu0
        %v685 = vadd.f32 %v333, %v684
        %v686 = vpop.f32.mrf.mxu0
        %v687 = vadd.f32 %v333, %v686
        %v688 = vpop.f32.mrf.mxu0
        %v689 = vadd.f32 %v338, %v688
        %v690 = vpop.f32.mrf.mxu0
        %v691 = vadd.f32 %v338, %v690
        %692 = vmatprep.mubr.bf16.mxu0 %v445
        %693 = vmatmul.mubr.bf16.gmra.mxu0 %v444
        %v694 = vpop.f32.mrf.mxu0
        %v695 = vadd.f32 %v343, %v694
        %v696 = vpop.f32.mrf.mxu0
        %v697 = vadd.f32 %v343, %v696
        %v698 = vpop.f32.mrf.mxu0
        %v699 = vadd.f32 %v348, %v698
        %v700 = vpop.f32.mrf.mxu0
        %v701 = vadd.f32 %v348, %v700
        %702 = vmatprep.mubr.bf16.mxu0 %v447
        %703 = vmatmul.mubr.bf16.gmra.mxu0 %v446
        %v704 = vpop.f32.mrf.mxu0
        %v705 = vadd.f32 %v353, %v704
        %v706 = vpop.f32.mrf.mxu0
        %v707 = vadd.f32 %v353, %v706
        %v708 = vpop.f32.mrf.mxu0
        %v709 = vadd.f32 %v358, %v708
        %v710 = vpop.f32.mrf.mxu0
        %v711 = vadd.f32 %v358, %v710
        %712 = vmatprep.mubr.bf16.mxu0 %v449
        %713 = vmatmul.mubr.bf16.gmra.mxu0 %v448
        %v714 = vpop.f32.mrf.mxu0
        %v715 = vadd.f32 %v363, %v714
        %v716 = vpop.f32.mrf.mxu0
        %v717 = vadd.f32 %v363, %v716
        %v718 = vpop.f32.mrf.mxu0
        %v719 = vadd.f32 %v368, %v718
        %v720 = vpop.f32.mrf.mxu0
        %v721 = vadd.f32 %v368, %v720
        %722 = vmatprep.mubr.bf16.mxu0 %v451
        %723 = vmatmul.mubr.bf16.gmra.mxu0 %v450
        %v724 = vpop.f32.mrf.mxu0
        %v725 = vadd.f32 %v373, %v724
        %v726 = vpop.f32.mrf.mxu0
        %v727 = vadd.f32 %v373, %v726
        %v728 = vpop.f32.mrf.mxu0
        %v729 = vadd.f32 %v378, %v728
        %v730 = vpop.f32.mrf.mxu0
        %v731 = vadd.f32 %v378, %v730
        %732 = vmatprep.mubr.bf16.mxu0 %v453
        %733 = vmatmul.mubr.bf16.gmra.mxu0 %v452
        %v734 = vpop.f32.mrf.mxu0
        %v735 = vadd.f32 %v383, %v734
        %v736 = vpop.f32.mrf.mxu0
        %v737 = vadd.f32 %v383, %v736
        %v738 = vpop.f32.mrf.mxu0
        %v739 = vadd.f32 %v388, %v738
        %v740 = vpop.f32.mrf.mxu0
        %v741 = vadd.f32 %v388, %v740
        %742 = vdwg.mxu0
        %v743 = vmax.f32 %v665, 0.0
        %v744 = vmax.f32 %v667, 0.0
        %v745 = vmax.f32 %v669, 0.0
        %v746 = vmax.f32 %v671, 0.0
        %v747 = vmax.f32 %v675, 0.0
        %v748 = vmax.f32 %v677, 0.0
        %v749 = vmax.f32 %v679, 0.0
        %v750 = vmax.f32 %v681, 0.0
        %v751 = vmax.f32 %v685, 0.0
        %v752 = vmax.f32 %v687, 0.0
        %v753 = vmax.f32 %v689, 0.0
        %v754 = vmax.f32 %v691, 0.0
        %v755 = vmax.f32 %v695, 0.0
        %v756 = vmax.f32 %v697, 0.0
        %v757 = vmax.f32 %v699, 0.0
        %v758 = vmax.f32 %v701, 0.0
        %v759 = vmax.f32 %v705, 0.0
        %v760 = vmax.f32 %v707, 0.0
        %v761 = vmax.f32 %v709, 0.0
        %v762 = vmax.f32 %v711, 0.0
        %v763 = vmax.f32 %v715, 0.0
        %v764 = vmax.f32 %v717, 0.0
        %v765 = vmax.f32 %v719, 0.0
        %v766 = vmax.f32 %v721, 0.0
        %v767 = vmax.f32 %v725, 0.0
        %v768 = vmax.f32 %v727, 0.0
        %v769 = vmax.f32 %v729, 0.0
        %v770 = vmax.f32 %v731, 0.0
        %v771 = vmax.f32 %v735, 0.0
        %v772 = vmax.f32 %v737, 0.0
        %v773 = vmax.f32 %v739, 0.0
        %v774 = vmax.f32 %v741, 0.0
        %v775 = vmin.f32 %v743, 1.0
        %v776 = vmin.f32 %v744, 1.0
        %v777 = vmin.f32 %v745, 1.0
        %v778 = vmin.f32 %v746, 1.0
        %v779 = vmin.f32 %v747, 1.0
        %v780 = vmin.f32 %v748, 1.0
        %v781 = vmin.f32 %v749, 1.0
        %v782 = vmin.f32 %v750, 1.0
        %v783 = vmin.f32 %v751, 1.0
        %v784 = vmin.f32 %v752, 1.0
        %v785 = vmin.f32 %v753, 1.0
        %v786 = vmin.f32 %v754, 1.0
        %v787 = vmin.f32 %v755, 1.0
        %v788 = vmin.f32 %v756, 1.0
        %v789 = vmin.f32 %v757, 1.0
        %v790 = vmin.f32 %v758, 1.0
        %v791 = vmin.f32 %v759, 1.0
        %v792 = vmin.f32 %v760, 1.0
        %v793 = vmin.f32 %v761, 1.0
        %v794 = vmin.f32 %v762, 1.0
        %v795 = vmin.f32 %v763, 1.0
        %v796 = vmin.f32 %v764, 1.0
        %v797 = vmin.f32 %v765, 1.0
        %v798 = vmin.f32 %v766, 1.0
        %v799 = vmin.f32 %v767, 1.0
        %v800 = vmin.f32 %v768, 1.0
        %v801 = vmin.f32 %v769, 1.0
        %v802 = vmin.f32 %v770, 1.0
        %v803 = vmin.f32 %v771, 1.0
        %v804 = vmin.f32 %v772, 1.0
        %v805 = vmin.f32 %v773, 1.0
        %v806 = vmin.f32 %v774, 1.0
        %v807 = vld [vmem:[%s3] sm:$0xff]
        %v808 = vld [vmem:[%s3 + $0x8] sm:$0xff]
        %v809 = vld [vmem:[%s3 + $0x10] sm:$0xff]
        %v810 = vld [vmem:[%s3 + $0x18] sm:$0xff]
        %v811 = vld [vmem:[%s3 + $0x20] sm:$0xff]
        %v812 = vld [vmem:[%s3 + $0x28] sm:$0xff]
        %v813 = vld [vmem:[%s3 + $0x30] sm:$0xff]
        %v814 = vld [vmem:[%s3 + $0x38] sm:$0xff]
        %v815 = vld [vmem:[%s3 + $0x40] sm:$0xff]
        %v816 = vld [vmem:[%s3 + $0x48] sm:$0xff]
        %v817 = vld [vmem:[%s3 + $0x50] sm:$0xff]
        %v818 = vld [vmem:[%s3 + $0x58] sm:$0xff]
        %v819 = vld [vmem:[%s3 + $0x60] sm:$0xff]
        %v820 = vld [vmem:[%s3 + $0x68] sm:$0xff]
        %v821 = vld [vmem:[%s3 + $0x70] sm:$0xff]
        %v822 = vld [vmem:[%s3 + $0x78] sm:$0xff]
        %824 = vset.pattern.permute.xlu0 0
        %825 = vperm.xlu0 %824, %v807
        %v826 = vpop.permute.xlu0 %825
        %829 = vset.pattern.permute.xlu0 0
        %830 = vperm.xlu0 %829, %v808
        %v831 = vpop.permute.xlu0 %830
        %834 = vset.pattern.permute.xlu0 0
        %835 = vperm.xlu0 %834, %v809
        %v836 = vpop.permute.xlu0 %835
        %839 = vset.pattern.permute.xlu0 0
        %840 = vperm.xlu0 %839, %v810
        %v841 = vpop.permute.xlu0 %840
        %844 = vset.pattern.permute.xlu0 0
        %845 = vperm.xlu0 %844, %v811
        %v846 = vpop.permute.xlu0 %845
        %849 = vset.pattern.permute.xlu0 0
        %850 = vperm.xlu0 %849, %v812
        %v851 = vpop.permute.xlu0 %850
        %854 = vset.pattern.permute.xlu0 0
        %855 = vperm.xlu0 %854, %v813
        %v856 = vpop.permute.xlu0 %855
        %859 = vset.pattern.permute.xlu0 0
        %860 = vperm.xlu0 %859, %v814
        %v861 = vpop.permute.xlu0 %860
        %864 = vset.pattern.permute.xlu0 0
        %865 = vperm.xlu0 %864, %v815
        %v866 = vpop.permute.xlu0 %865
        %869 = vset.pattern.permute.xlu0 0
        %870 = vperm.xlu0 %869, %v816
        %v871 = vpop.permute.xlu0 %870
        %874 = vset.pattern.permute.xlu0 0
        %875 = vperm.xlu0 %874, %v817
        %v876 = vpop.permute.xlu0 %875
        %879 = vset.pattern.permute.xlu0 0
        %880 = vperm.xlu0 %879, %v818
        %v881 = vpop.permute.xlu0 %880
        %884 = vset.pattern.permute.xlu0 0
        %885 = vperm.xlu0 %884, %v819
        %v886 = vpop.permute.xlu0 %885
        %889 = vset.pattern.permute.xlu0 0
        %890 = vperm.xlu0 %889, %v820
        %v891 = vpop.permute.xlu0 %890
        %894 = vset.pattern.permute.xlu0 0
        %895 = vperm.xlu0 %894, %v821
        %v896 = vpop.permute.xlu0 %895
        %899 = vset.pattern.permute.xlu0 0
        %900 = vperm.xlu0 %899, %v822
        %v901 = vpop.permute.xlu0 %900
        %v903 = vmul.f32 %v775, %v826
        %v904 = vmul.f32 %v776, %v826
        %v905 = vmul.f32 %v777, %v831
        %v906 = vmul.f32 %v778, %v831
        %v907 = vmul.f32 %v779, %v836
        %v908 = vmul.f32 %v780, %v836
        %v909 = vmul.f32 %v781, %v841
        %v910 = vmul.f32 %v782, %v841
        %v911 = vmul.f32 %v783, %v846
        %v912 = vmul.f32 %v784, %v846
        %v913 = vmul.f32 %v785, %v851
        %v914 = vmul.f32 %v786, %v851
        %v915 = vmul.f32 %v787, %v856
        %v916 = vmul.f32 %v788, %v856
        %v917 = vmul.f32 %v789, %v861
        %v918 = vmul.f32 %v790, %v861
        %v919 = vmul.f32 %v791, %v866
        %v920 = vmul.f32 %v792, %v866
        %v921 = vmul.f32 %v793, %v871
        %v922 = vmul.f32 %v794, %v871
        %v923 = vmul.f32 %v795, %v876
        %v924 = vmul.f32 %v796, %v876
        %v925 = vmul.f32 %v797, %v881
        %v926 = vmul.f32 %v798, %v881
        %v927 = vmul.f32 %v799, %v886
        %v928 = vmul.f32 %v800, %v886
        %v929 = vmul.f32 %v801, %v891
        %v930 = vmul.f32 %v802, %v891
        %v931 = vmul.f32 %v803, %v896
        %v932 = vmul.f32 %v804, %v896
        %v933 = vmul.f32 %v805, %v901
        %v934 = vmul.f32 %v806, %v901
        %v935 = vadd.f32 %v903, %v905
        %v936 = vadd.f32 %v935, %v907
        %v937 = vadd.f32 %v936, %v909
        %v938 = vadd.f32 %v937, %v911
        %v939 = vadd.f32 %v938, %v913
        %v940 = vadd.f32 %v939, %v915
        %v941 = vadd.f32 %v940, %v917
        %v942 = vadd.f32 %v941, %v919
        %v943 = vadd.f32 %v942, %v921
        %v944 = vadd.f32 %v943, %v923
        %v945 = vadd.f32 %v944, %v925
        %v946 = vadd.f32 %v945, %v927
        %v947 = vadd.f32 %v946, %v929
        %v948 = vadd.f32 %v947, %v931
        %v949 = vadd.f32 %v948, %v933
        %v950 = vrot.slane %v949, 4
        %v951 = vadd.f32 %v949, %v950
        %v952 = vrot.slane %v951, 2
        %v953 = vadd.f32 %v951, %v952
        %v954 = vrot.slane %v953, 1
        %v955 = vadd.f32 %v953, %v954
        %v956 = vadd.f32 %v904, %v906
        %v957 = vadd.f32 %v956, %v908
        %v958 = vadd.f32 %v957, %v910
        %v959 = vadd.f32 %v958, %v912
        %v960 = vadd.f32 %v959, %v914
        %v961 = vadd.f32 %v960, %v916
        %v962 = vadd.f32 %v961, %v918
        %v963 = vadd.f32 %v962, %v920
        %v964 = vadd.f32 %v963, %v922
        %v965 = vadd.f32 %v964, %v924
        %v966 = vadd.f32 %v965, %v926
        %v967 = vadd.f32 %v966, %v928
        %v968 = vadd.f32 %v967, %v930
        %v969 = vadd.f32 %v968, %v932
        %v970 = vadd.f32 %v969, %v934
        %v971 = vrot.slane %v970, 4
        %v972 = vadd.f32 %v970, %v971
        %v973 = vrot.slane %v972, 2
        %v974 = vadd.f32 %v972, %v973
        %v975 = vrot.slane %v974, 1
        %v976 = vadd.f32 %v974, %v975
        %s977 = sld [smem:[#allocation2]]
        %v978 = vstv %s977
        %v979 = vadd.f32 %v955, %v978
        %v980 = vadd.f32 %v976, %v978
        %v983 = vcombine.low %v979, %v980
        %v985 = vunpack.c.l.s4 1966171168
        %v986 = vunpack.c.0.s8 %v985
        %v987 = vlaneseq
        %v988 = vshrl.u32 %v987, 7
        %v989 = vsub.s32 %v986, %v988
        %v990 = vrot.slane %v983, %v989
        %v992 = vunpack.c.l.s4 1966171168
        %v993 = vunpack.c.0.s8 %v992
        %v994 = vlaneseq
        %v995 = vshrl.u32 %v994, 7
        %v996 = vsub.s32 %v993, %v995
        %v997 = vrot.slane %v990, %v996
        %v999 = vlaneseq
        %vm1000 = vcmp.ge.s32.totalorder %v999, 0
        %vm1001 = vcmp.lt.s32.totalorder %v999, 256
        %vm1002 = vmand %vm1000, %vm1001
        %1003 = vst.msk [vmem:[%s244] sm:$0x3] %vm1002, %v997
        %s1004 = sand.u32 %s141, 1
        %s1005 = scalar_lea.sflag [#allocation5], %s1004
        %s1006 = sand.u32 %s141, 1
        %s1007 = smul.addr %s1006, 2
        %s1008 = scalar_lea.vmem [#allocation6], %s1007
        // Predicated region
        $region45: #{tpu_custom_call.1} parent=39 // pred_check
          %p1009 = pneg %p151
        $region46: #{tpu_custom_call.1} parent=39 // pred_check_branch
          %1011 = sbr.rel (%p1009) target = $region48
        $region47: #{tpu_custom_call.1} parent=39 // pred_region
          %s1013 = ssub.s32 32, 32
          %1014 = vsyncadd %s1005, %s1013
          %s1015 = smul.addr %s23, 2
          %s1016 = smul.addr %s1015, 16
          %s1017 = scalar_lea.hbm %s5, %s1016
          %s1019 = sshll.u32 %s1008, 4
          %s1020 = int_to_ptr.vmem [resolvable:$true] %s1019
          %1022 = dma.vmem_to_hbm [thread:$0]  %s1020, 32, %s1017, %s1005
        $region48: #{tpu_custom_call.1} parent=39 // pred_fallthru
          _
      $region40: #{tpu_custom_call.1} parent=5 // pred_fallthru
        _
      %p1023 = scmp.le.s32.totalorder 2, %s18
      // Predicated region
      $region49: #{tpu_custom_call.1} parent=5 // pred_check
        %p1024 = pneg %p1023
      $region50: #{tpu_custom_call.1} parent=5 // pred_check_branch
        %1026 = sbr.rel (%p1024) target = $region52
      $region51: #{tpu_custom_call.1} parent=5 // pred_region
        %s1027 = ssub.s32 %s18, 2
        // Predicated region
        $region53: #{tpu_custom_call.1} parent=51 // pred_check
          %p1028 = pneg %p157
        $region54: #{tpu_custom_call.1} parent=51 // pred_check_branch
          %1030 = sbr.rel (%p1028) target = $region56
        $region55: #{tpu_custom_call.1} parent=51 // pred_region
          %s1031 = sand.u32 %s142, 1
          %s1032 = scalar_lea.sflag [#allocation5], %s1031
          %s1033 = sand.u32 %s142, 1
          %s1034 = smul.addr %s1033, 2
          %s1035 = scalar_lea.vmem [#allocation6], %s1034
          %1036 = dma.done %s1032, 32
        $region56: #{tpu_custom_call.1} parent=51 // pred_fallthru
          _
      $region52: #{tpu_custom_call.1} parent=5 // pred_fallthru
        _
    $region6: #{tpu_custom_call.1} parent=1 // loop_footer
      %s22 = sadd.s32 1, %s18
    $region7: #{tpu_custom_call.1} parent=1 // loop_footer_branch
      %17 = sbr.rel target = $region3
    $region8: #{tpu_custom_call.1} parent=1 // loop_exit
      _
    %1037 = vsyncpa [#allocation4], 1
    %s1038 = scalar_lea.sflag [#allocation4], 1
    %1039 = vsyncpa %s1038, 1
    %1040 = vsyncpa [#allocation5], 1
    %s1041 = scalar_lea.sflag [#allocation5], 1
    %1042 = vsyncpa %s1041, 1

</llo_original>
